<compile_context>
chip_gen: v7x
topology: tpu7x:2x2x1
jax: 0.10.0
libtpu: 0.0.40
codegen_flags: <defaults>
</compile_context>

<pallas_src>
import functools

import jax
import jax.numpy as jnp
from jax.experimental import pallas as pl
from jax.experimental.pallas import tpu as pltpu

_MIB = 1024 * 1024


def _cdiv(a, b):
    return -(-a // b)


def _round_up(a, b):
    return _cdiv(a, b) * b


def _tpu_memory_config():
    """Returns (scoped vmem_limit_bytes, maybe_multi_tensorcore) for this chip."""
    default_limit = 32 * _MIB
    try:
        info = pltpu.get_tpu_info()
        phys = int(getattr(info, "vmem_capacity_bytes"))
    except Exception:
        return default_limit, False
    # Keep ~1/3 of physical VMEM as headroom; never request more than 64 MiB.
    limit = max(default_limit, min(64 * _MIB, (phys * 2) // 3))
    limit = min(limit, phys)
    # v7x-class parts expose 64 MiB VMEM per TensorCore and have 2 TCs per chip.
    maybe_multi_tc = phys <= 80 * _MIB
    return limit, maybe_multi_tc


def _run_first_ok(build, row_semantics_candidates):
    """Try dimension-semantics candidates in order (e.g. CORE_PARALLEL on v7x),
    falling back to the always-safe variant if Mosaic rejects one."""
    last_err = None
    for sem in row_semantics_candidates:
        try:
            return build(sem)
        except Exception as err:  # e.g. CORE_PARALLEL unsupported on this chip/grid
            last_err = err
    raise last_err


# --------------------------------------------------------------------------- #
# Kernels
# --------------------------------------------------------------------------- #
def _instance_norm_kernel(x_ref, o_ref, *, epsilon, inv_s, valid_lanes, masked):
    # Block: (r_blk, S_pad) -- r_blk independent (n, c) rows on sublanes,
    # S_pad (multiple of 128) spatial elements on lanes.
    x = x_ref[...].astype(jnp.float32)                    # f32 stats (safe on v5e too)
    mean = jnp.sum(x, axis=-1, keepdims=True) * inv_s     # zero padding -> exact sum
    xc = x - mean
    sq = xc * xc
    if masked:  # lane axis was padded: exclude pad lanes from the variance
        lane = jax.lax.broadcasted_iota(jnp.int32, x.shape, dimension=x.ndim - 1)
        sq = jnp.where(lane < valid_lanes, sq, 0.0)
    var = jnp.sum(sq, axis=-1, keepdims=True) * inv_s     # centered variance (stable)
    o_ref[...] = (xc * jax.lax.rsqrt(var + epsilon)).astype(o_ref.dtype)


def _stats_kernel(x_ref, mean_ref, rstd_ref, *, epsilon, inv_s):
    # Large-plane pass 1: accumulate per-row sum / sum-of-squares over the spatial
    # ("arbitrary") grid axis; finalize mean / rsqrt(var + eps) on the last step.
    j = pl.program_id(1)

    @pl.when(j == 0)
    def _():
        mean_ref[...] = jnp.zeros_like(mean_ref)
        rstd_ref[...] = jnp.zeros_like(rstd_ref)

    x = x_ref[...].astype(jnp.float32)
    mean_ref[...] += jnp.sum(x, axis=-1, keepdims=True)
    rstd_ref[...] += jnp.sum(x * x, axis=-1, keepdims=True)

    @pl.when(j == pl.num_programs(1) - 1)
    def _():
        mean = mean_ref[...] * inv_s
        var = jnp.maximum(rstd_ref[...] * inv_s - mean * mean, 0.0)
        mean_ref[...] = mean
        rstd_ref[...] = jax.lax.rsqrt(var + epsilon)


def _normalize_kernel(x_ref, mean_ref, rstd_ref, o_ref):
    # Large-plane pass 2: elementwise normalize one (r_blk, s_blk) tile.
    x = x_ref[...].astype(jnp.float32)
    o_ref[...] = ((x - mean_ref[...]) * rstd_ref[...]).astype(o_ref.dtype)


# --------------------------------------------------------------------------- #
# Path builders
# --------------------------------------------------------------------------- #
def _single_pass(x2, R, S, S_pad, r_blk, epsilon, vmem_limit, row_sems):
    if S_pad != S:
        x2 = jnp.pad(x2, ((0, 0), (0, S_pad - S)))  # zeros keep the sums exact
    kernel = functools.partial(
        _instance_norm_kernel, epsilon=float(epsilon), inv_s=1.0 / float(S),
        valid_lanes=S, masked=(S_pad != S))

    def build(row_sem):
        return pl.pallas_call(
            kernel,
            out_shape=jax.ShapeDtypeStruct((R, S_pad), x2.dtype),
            grid=(_cdiv(R, r_blk),),
            in_specs=[pl.BlockSpec((r_blk, S_pad), lambda i: (i, 0))],
            out_specs=pl.BlockSpec((r_blk, S_pad), lambda i: (i, 0)),
            compiler_params=pltpu.CompilerParams(
                dimension_semantics=(row_sem,),
                vmem_limit_bytes=vmem_limit),
        )(x2)

    return _run_first_ok(build, row_sems)


def _two_pass(x2, R, S, r_blk, s_blk, epsilon, vmem_limit, row_sems):
    arb = getattr(pltpu, "ARBITRARY", "arbitrary")
    S_pad = _round_up(S, s_blk)
    if S_pad != S:
        x2 = jnp.pad(x2, ((0, 0), (0, S_pad - S)))  # zeros contribute 0 to both sums
    grid = (_cdiv(R, r_blk), S_pad // s_blk)

    stats = functools.partial(_stats_kernel, epsilon=float(epsilon), inv_s=1.0 / float(S))

    def build_stats(row_sem):
        return pl.pallas_call(
            stats,
            out_shape=(jax.ShapeDtypeStruct((R, 1), jnp.float32),
                       jax.ShapeDtypeStruct((R, 1), jnp.float32)),
            grid=grid,
            in_specs=[pl.BlockSpec((r_blk, s_blk), lambda i, j: (i, j))],
            out_specs=(pl.BlockSpec((r_blk, 1), lambda i, j: (i, 0)),
                       pl.BlockSpec((r_blk, 1), lambda i, j: (i, 0))),
            compiler_params=pltpu.CompilerParams(
                dimension_semantics=(row_sem, arb),
                vmem_limit_bytes=vmem_limit),
        )(x2)

    mean, rstd = _run_first_ok(build_stats, row_sems)

    def build_norm(row_sem):
        return pl.pallas_call(
            _normalize_kernel,
            out_shape=jax.ShapeDtypeStruct((R, S_pad), x2.dtype),
            grid=grid,
            in_specs=[pl.BlockSpec((r_blk, s_blk), lambda i, j: (i, j)),
                      pl.BlockSpec((r_blk, 1), lambda i, j: (i, 0)),
                      pl.BlockSpec((r_blk, 1), lambda i, j: (i, 0))],
            out_specs=pl.BlockSpec((r_blk, s_blk), lambda i, j: (i, j)),
            compiler_params=pltpu.CompilerParams(
                dimension_semantics=(row_sem, arb),
                vmem_limit_bytes=vmem_limit),
        )(x2, mean, rstd)

    return _run_first_ok(build_norm, row_sems)


# --------------------------------------------------------------------------- #
# Public wrapper
# --------------------------------------------------------------------------- #
def instance_norm(x, epsilon=1e-08, *, _force_two_pass=False, _force_spatial_block=None):
    """InstanceNorm forward: x is (N, C, H, W); returns same shape/dtype.

    Matches the reference module (affine=False): (x - mean_{H,W}) * rsqrt(var_{H,W} + eps),
    default eps = 1e-8 as in the PyTorch module spec (note: nn.InstanceNorm2d uses 1e-5).
    """
    N, C, H, W = x.shape
    R = N * C
    S = H * W
    itemsize = x.dtype.itemsize

    # Sublane packing: 8 rows/vreg for 32-bit, 16 for 16-bit, 32 for 8-bit dtypes.
    row_align = 8 * max(1, 4 // itemsize)

    # Lane-dense spatial axis: pad H*W up to a multiple of 128 lanes.
    S_pad = _round_up(S, 128)

    x2 = x.reshape(R, S)  # contiguous row-major -> free reshape; rows independent

    vmem_limit, maybe_multi_tc = _tpu_memory_config()
    usable = (vmem_limit * 3) // 4  # headroom for compiler scratch / semaphores

    # dtype-aware per-row VMEM cost of the fused single-pass kernel:
    # in x2 (double-buffered) + out x2 (double-buffered) + ~3 f32 temporaries.
    per_row_bytes = S_pad * (4 * itemsize + 12)
    max_rows = usable // per_row_bytes
    if _force_two_pass:
        max_rows = 0  # test hook: exercise the large-plane path on small inputs

    if R <= max_rows:
        r_blk = R  # single block == full dim (always legal)
    elif max_rows >= row_align:
        r_blk = (max_rows // row_align) * row_align
    else:
        r_blk = 0  # plane too large for single-pass -> two-pass path

    r2 = R if R <= row_align else row_align  # minimum-height row block (two-pass)
    n_row_blocks = _cdiv(R, r_blk) if r_blk > 0 else _cdiv(R, r2)

    par = getattr(pltpu, "PARALLEL", "parallel")
    row_sems = [par]
    if maybe_multi_tc and n_row_blocks > 1 and hasattr(pltpu, "CORE_PARALLEL"):
        # v7x-class: actually shard independent (n, c) row blocks across both
        # TensorCores; plain "parallel" was measured to be a near no-op.
        # TODO(synk): confirm in xprof that both v7x TCs are active for this kernel.
        row_sems = [pltpu.CORE_PARALLEL, par]

    if r_blk > 0:
        out2 = _single_pass(x2, R, S, S_pad, r_blk, epsilon, vmem_limit, row_sems)
    else:
        # Two-pass (stats then normalize) for planes that overflow VMEM
        # (hits v7x's 64 MiB physical VMEM first).
        if _force_spatial_block is not None:
            s_blk = int(_force_spatial_block)
        else:
            s_cap = max(128, ((4 * _MIB) // (r2 * itemsize)) // 128 * 128)
            n_chunks = _cdiv(S, s_cap)
            s_blk = _round_up(_cdiv(S, n_chunks), 128)  # minimize lane padding waste
        out2 = _two_pass(x2, R, S, r2, s_blk, epsilon, vmem_limit, row_sems)

    if out2.shape[1] != S:
        out2 = out2[:, :S]
    return out2.reshape(N, C, H, W)


def _reference_instance_norm(x, epsilon=1e-08):
    x32 = x.astype(jnp.float32)
    mean = jnp.mean(x32, axis=(2, 3), keepdims=True)
    xc = x32 - mean
    inv = jax.lax.rsqrt(jnp.mean(xc * xc, axis=(2, 3), keepdims=True) + epsilon)
    return (xc * inv).astype(x.dtype)


if __name__ == "__main__":
    key = jax.random.PRNGKey(0)
    # Module has no learned parameters (epsilon only), so only an input is needed.
    x = jax.random.normal(key, (2, 4, 16, 16), dtype=jnp.float32)

    # Main path: lane-dense single-pass kernel (S = 256 is already a lane multiple).
    out = jax.block_until_ready(instance_norm(x))
    ref = _reference_instance_norm(x)
    assert out.shape == x.shape and out.dtype == x.dtype
    assert jnp.allclose(out, ref, atol=1e-5, rtol=1e-5)

    # Padded-lane path: S = 7*7 = 49 is not a multiple of 128 (masked variance).
    x_odd = jax.random.normal(jax.random.PRNGKey(1), (2, 3, 7, 7), dtype=jnp.float32)
    out_odd = jax.block_until_ready(instance_norm(x_odd))
    assert jnp.allclose(out_odd, _reference_instance_norm(x_odd), atol=1e-5, rtol=1e-5)

    # Large-plane two-pass path, forced on a small input so it is exercised here.
    out_tp = jax.block_until_ready(
        instance_norm(x, _force_two_pass=True, _force_spatial_block=128))
    assert jnp.allclose(out_tp, ref, atol=1e-5, rtol=1e-5)

    print("KERNEL_OK")
</pallas_src>

<mosaic_0001>
module attributes {stable_mosaic.version = 11 : i64} {
  func.func @_instance_norm_kernel(%arg0: i32, %arg1: memref<8x256xf32, #tpu.memory_space<vmem>>, %arg2: memref<8x256xf32, #tpu.memory_space<vmem>>) attributes {dimension_semantics = [#tpu.dimension_semantics<parallel>], iteration_bounds = array<i64: 1>, scalar_prefetch = 0 : i64, scratch_operands = 0 : i64, tpu.core_type = #tpu.core_type<tc>, window_params = [{transform_indices = @transform_0, window_bounds = array<i64: 8, 256>}, {transform_indices = @transform_1, window_bounds = array<i64: 8, 256>}]} {
    %c0 = arith.constant 0 : index
    %c0_0 = arith.constant 0 : index
    %0 = vector.load %arg1[%c0, %c0_0] : memref<8x256xf32, #tpu.memory_space<vmem>>, vector<8x256xf32>
    %cst = arith.constant dense<0.000000e+00> : vector<8xf32>
    %1 = vector.multi_reduction <add>, %0, %cst [1] : vector<8x256xf32> to vector<8xf32>
    %2 = vector.shape_cast %1 : vector<8xf32> to vector<8x1xf32>
    %cst_1 = arith.constant 3.906250e-03 : f32
    %3 = vector.broadcast %cst_1 : f32 to vector<8x1xf32>
    %4 = arith.mulf %2, %3 : vector<8x1xf32>
    %5 = vector.broadcast %4 : vector<8x1xf32> to vector<8x256xf32>
    %6 = arith.subf %0, %5 : vector<8x256xf32>
    %7 = arith.mulf %6, %6 : vector<8x256xf32>
    %cst_2 = arith.constant dense<0.000000e+00> : vector<8xf32>
    %8 = vector.multi_reduction <add>, %7, %cst_2 [1] : vector<8x256xf32> to vector<8xf32>
    %9 = vector.shape_cast %8 : vector<8xf32> to vector<8x1xf32>
    %cst_3 = arith.constant 3.906250e-03 : f32
    %10 = vector.broadcast %cst_3 : f32 to vector<8x1xf32>
    %11 = arith.mulf %9, %10 : vector<8x1xf32>
    %cst_4 = arith.constant 9.99999993E-9 : f32
    %12 = vector.broadcast %cst_4 : f32 to vector<8x1xf32>
    %13 = arith.addf %11, %12 : vector<8x1xf32>
    %14 = math.rsqrt %13 : vector<8x1xf32>
    %15 = vector.broadcast %14 : vector<8x1xf32> to vector<8x256xf32>
    %16 = arith.mulf %6, %15 : vector<8x256xf32>
    %c0_5 = arith.constant 0 : index
    %c0_6 = arith.constant 0 : index
    %17 = vector.load %arg2[%c0_5, %c0_6] : memref<8x256xf32, #tpu.memory_space<vmem>>, vector<8x256xf32>
    tpu.vector_store %arg2[%c0_5, %c0_6], %16 {strides = array<i32>} : memref<8x256xf32, #tpu.memory_space<vmem>>, vector<8x256xf32>,
    return
  }
  func.func @transform_0(%arg0: i32) -> (i32, i32) {
    %c0_i32 = arith.constant 0 : i32
    %c0_i32_0 = arith.constant 0 : i32
    return %arg0, %c0_i32 : i32, i32
  }
  func.func @transform_1(%arg0: i32) -> (i32, i32) {
    %c0_i32 = arith.constant 0 : i32
    %c0_i32_0 = arith.constant 0 : i32
    return %arg0, %c0_i32 : i32, i32
  }
}

</mosaic_0001>

<llo_original>
// kernel: tpu_custom_call.1
$region0: #{tpu_custom_call.1}
  #allocation0 [shape = 'u32[]', space=smem, size = 0x4, offset = 0x4, fixed_abs, tag = 'smem constant byte address 0x4 - core index']
  #allocation1 [shape = 'u32[144,128]{1,0:T(1,128)}', space=vmem, size = 0x12000, scoped, tag = 'internal scratch']
  %s0 = inlined_call_operand.hbm [shape: f32[8,256], index: 0, kind: input, shape index: {}]
  %s1 = inlined_call_operand.hbm [shape: f32[8,256], index: 1, kind: output, shape index: {}]
  %s2 = sld [smem:[#allocation0]]
  $region18: #{tpu_custom_call.1} parent=0
    _
  %s4 = ssub.s32 1, %s2
  %s5 = scalar_select 0, %s4, %s2
  $region1: #{tpu_custom_call.1} parent=0
    #allocation2 [shape = 'u8[8192]{0}', space=vmem, size = 0x2000, scoped, tag = 'input window, operand 0, single buffered']
    #allocation3 [shape = 's32[1]{0}', space=sflag, size = 0x4, scoped, tag = 'scoped memory for tpu_custom_call.1']
    #allocation4 [shape = 's32[1]{0}', space=sflag, size = 0x4, scoped, tag = 'scoped memory for tpu_custom_call.1']
    #allocation5 [shape = 'u8[8192]{0}', space=vmem, size = 0x2000, scoped, tag = 'output window, operand 0, single buffered']
    %6 = vsyncpa [#allocation3], 0
    %7 = vsyncpa [#allocation4], 0
    // Predicated region
    $region2: #{tpu_custom_call.1} parent=1 // pred_check
      _
    $region3: #{tpu_custom_call.1} parent=1 // pred_check_branch
      %9 = sbr.rel (0) target = $region5
    $region4: #{tpu_custom_call.1} parent=1 // pred_region
      %s11 = ssub.s32 256, 256
      %12 = vsyncadd [#allocation3], %s11
      %s14 = sshll.u32 [#allocation2], 4
      %s15 = int_to_ptr.vmem [resolvable:$true] %s14
      %17 = dma.hbm_to_vmem [thread:$0]  %s0, 256, %s15, [#allocation3]
    $region5: #{tpu_custom_call.1} parent=1 // pred_fallthru
      _
    // Predicated region
    $region6: #{tpu_custom_call.1} parent=1 // pred_check
      _
    $region7: #{tpu_custom_call.1} parent=1 // pred_check_branch
      %19 = sbr.rel (0) target = $region9
    $region8: #{tpu_custom_call.1} parent=1 // pred_region
      %20 = dma.done [#allocation3], 256
    $region9: #{tpu_custom_call.1} parent=1 // pred_fallthru
      _
    %v21 = vld [vmem:[#allocation2] sm:$0xff]
    %v22 = vld [vmem:[#allocation2 + $0x8] sm:$0xff]
    %v23 = vadd.f32 %v21, %v22
    %24 = vadd.xlane.f32.xlu0 %v23
    %v25 = vpop.xlane.xlu0 %24
    %v26 = vmul.f32 %v25, 0.00390625
    %v27 = vsub.f32 %v21, %v26
    %v28 = vsub.f32 %v22, %v26
    %v29 = vmul.f32 %v27, %v27
    %v30 = vmul.f32 %v28, %v28
    %v31 = vadd.f32 %v29, %v30
    %32 = vadd.xlane.f32.xlu0 %v31
    %v33 = vpop.xlane.xlu0 %32
    %v34 = vmul.f32 %v33, 0.00390625
    %v35 = vadd.f32 %v34, 1e-08
    %v36 = vrsqrt.pop %v35
    %v37 = vmul.f32 %v27, %v36
    %v38 = vmul.f32 %v28, %v36
    %39 = vst [vmem:[#allocation5] sm:$0xff] %v37
    %40 = vst [vmem:[#allocation5 + $0x8] sm:$0xff] %v38
    // Predicated region
    $region10: #{tpu_custom_call.1} parent=1 // pred_check
      _
    $region11: #{tpu_custom_call.1} parent=1 // pred_check_branch
      %42 = sbr.rel (0) target = $region13
    $region12: #{tpu_custom_call.1} parent=1 // pred_region
      %s44 = ssub.s32 256, 256
      %45 = vsyncadd [#allocation4], %s44
      %s47 = sshll.u32 [#allocation5], 4
      %s48 = int_to_ptr.vmem [resolvable:$true] %s47
      %50 = dma.vmem_to_hbm [thread:$0]  %s48, 256, %s1, [#allocation4]
    $region13: #{tpu_custom_call.1} parent=1 // pred_fallthru
      _
    // Predicated region
    $region14: #{tpu_custom_call.1} parent=1 // pred_check
      _
    $region15: #{tpu_custom_call.1} parent=1 // pred_check_branch
      %52 = sbr.rel (0) target = $region17
    $region16: #{tpu_custom_call.1} parent=1 // pred_region
      %53 = dma.done [#allocation4], 256
    $region17: #{tpu_custom_call.1} parent=1 // pred_fallthru
      _
    %54 = vsyncpa [#allocation3], 1
    %55 = vsyncpa [#allocation4], 1

</llo_original>
